<compile_context>
chip_gen: v6e
topology: v6e:2x2x1
jax: 0.10.0
libtpu: 0.0.40
codegen_flags: <defaults>
</compile_context>

<pallas_src>
import jax
import jax.numpy as jnp
from jax import lax
from jax.experimental import pallas as pl
from jax.experimental.pallas import tpu as pltpu


def _vmem_limit(nbytes):
    """Scoped-VMEM limit: actual need + headroom, clamped for v7x's 64 MiB."""
    return int(min(max(int(nbytes * 1.5) + (2 << 20), 32 << 20), 56 << 20))


# ---------------------------------------------------------------------------
# Embedding: batched data-dependent row gather. One grid step per timestep,
# B row DMAs in flight, bf16 output. Padding row of the table is zero, which
# reproduces padding_idx behaviour.
# ---------------------------------------------------------------------------
def _embed_gather_kernel(ids_ref, table_ref, out_ref, buf_ref, sem_ref):
    t = pl.program_id(0)
    n_rows, _ = buf_ref.shape
    vocab = table_ref.shape[0]
    base = t * n_rows
    for r in range(n_rows):                      # issue the whole DMA bank
        row = jnp.clip(ids_ref[base + r], 0, vocab - 1)   # guard OOB DMA
        pltpu.make_async_copy(table_ref.at[row], buf_ref.at[r],
                              sem_ref.at[r]).start()
    for r in range(n_rows):                      # drain it
        pltpu.make_async_copy(table_ref.at[0], buf_ref.at[r],
                              sem_ref.at[r]).wait()
    out_ref[...] = buf_ref[...].astype(out_ref.dtype)


def embedding_lookup(token_ids, table):
    T, B = token_ids.shape
    V, E = table.shape
    ids = token_ids.reshape(T * B).astype(jnp.int32)
    vmem_need = B * E * table.dtype.itemsize + 2 * B * E * 2
    out = pl.pallas_call(
        _embed_gather_kernel,
        out_shape=jax.ShapeDtypeStruct((T, B, E), jnp.bfloat16),
        grid_spec=pltpu.PrefetchScalarGridSpec(
            num_scalar_prefetch=1,
            grid=(T,),
            in_specs=[pl.BlockSpec(memory_space=pl.ANY)],      # table stays in HBM
            out_specs=pl.BlockSpec((None, B, E), lambda t, ids_ref: (t, 0, 0)),
            scratch_shapes=[pltpu.VMEM((B, E), table.dtype),
                            pltpu.SemaphoreType.DMA((B,))],
        ),
        compiler_params=pltpu.CompilerParams(
            dimension_semantics=("parallel",),
            vmem_limit_bytes=_vmem_limit(vmem_need),
        ),
    )(ids, table)
    return out                                                  # (T, B, E) bf16


# ---------------------------------------------------------------------------
# One bidirectional LSTM layer: grid = (2 directions, T tiles).
# h/c are carried in scratch across T tiles; the bwd direction walks tiles
# (and rows within a tile) in reverse via the index_map / local index.
# ---------------------------------------------------------------------------
def _bilstm_layer_kernel(len_ref, x_ref, wih_ref, whh_ref, b_ref,
                         y_ref, c_ref, h_scr, c_scr, pre_scr):
    # len_ref : (B, 1)        int32  per-sequence lengths
    # x_ref   : (Tt, B, Din)  bf16   this tile of the layer input
    # wih_ref : (Din, 4H)     bf16   this direction's input weights (i,f,o,g cols)
    # whh_ref : (H, 4H)       bf16
    # b_ref   : (1, 4H)       f32    b_ih + b_hh
    # y_ref   : (Tt, B, H)    bf16   this direction's half of the output tile
    # c_ref   : (B, H)        f32    final cell state (revisited across tiles)
    Tt, B, Din = x_ref.shape
    H = whh_ref.shape[0]
    d = pl.program_id(0)
    tt = pl.program_id(1)
    nt = pl.num_programs(1)
    is_bwd = d == 1

    # Zero the carried state at the start of each direction's traversal.
    @pl.when(tt == 0)
    def _():
        h_scr[...] = jnp.zeros_like(h_scr)
        c_scr[...] = jnp.zeros_like(c_scr)

    # Hoisted input projection for this tile: one MXU matmul, stored as bf16
    # pre-gates (the f32 bias is added inside the recurrence).
    pre_scr[...] = (
        jnp.dot(x_ref[...].reshape(Tt * B, Din), wih_ref[...],
                preferred_element_type=jnp.float32)
        .reshape(Tt, B, 4 * H)
        .astype(pre_scr.dtype)
    )

    bias = b_ref[...]                                       # (1, 4H) f32
    whh = whh_ref[...]                                      # (H, 4H) bf16
    # Hoisted lane broadcast of the lengths (one cross-lane op per tile).
    lens_bh = jnp.broadcast_to(len_ref[...], (B, H))        # (B, H) int32

    # Global time index of this tile's first row (bwd tiles are reversed).
    blk = (1 - d) * tt + d * (nt - 1 - tt)
    t0 = blk * Tt

    def step(s, carry):
        li = jnp.where(is_bwd, Tt - 1 - s, s)               # local row in tile
        tg = t0 + li                                         # global timestep
        m = tg < lens_bh                                     # (B, H) validity mask
        h = h_scr[...]
        c = c_scr[...]
        g = (pre_scr[li] + bias
             + jnp.dot(h.astype(jnp.bfloat16), whh,
                       preferred_element_type=jnp.float32))  # (B, 4H) f32
        # sigmoid(i, f, o) as one contiguous tanh-based EUP op.
        sg = 0.5 * jnp.tanh(0.5 * g[:, :3 * H]) + 0.5
        i_g = sg[:, 0 * H:1 * H]
        f_g = sg[:, 1 * H:2 * H]
        o_g = sg[:, 2 * H:3 * H]
        g_g = jnp.tanh(g[:, 3 * H:4 * H])
        c_new = f_g * c + i_g * g_g
        h_new = o_g * jnp.tanh(c_new)
        # Masked state update == pack_padded_sequence semantics.
        h_scr[...] = jnp.where(m, h_new, h)
        c_scr[...] = jnp.where(m, c_new, c)
        y_ref[li] = jnp.where(m, h_new, 0.0).astype(y_ref.dtype)
        return carry

    # unroll=1: g alone is (B,4H) f32; unrolling would double live vregs.
    lax.fori_loop(0, Tt, step, 0)
    c_ref[...] = c_scr[...].astype(c_ref.dtype)


def bilstm_layer(x, lengths_col, wih, whh, bias, t_tile=None):
    # x: (T, B, Din) bf16 ; wih: (2, Din, 4H) bf16 ; whh: (2, H, 4H) bf16
    # bias: (2, 1, 4H) f32 ; lengths_col: (B, 1) int32
    T, B, Din = x.shape
    H = whh.shape[1]
    assert H % 128 == 0, "pad hidden size to a multiple of 128 (lane-dense split output)"
    if t_tile is None:
        t_tile = max(dv for dv in range(1, min(T, 32) + 1) if T % dv == 0)
    assert T % t_tile == 0
    nt = T // t_tile

    bf, f4 = 2, 4
    vmem_need = (
        2 * t_tile * B * Din * bf          # x tile (double-buffered)
        + 2 * t_tile * B * H * bf          # y tile
        + 2 * Din * 4 * H * bf             # w_ih
        + 2 * H * 4 * H * bf               # w_hh
        + 2 * 4 * H * f4                   # bias
        + 2 * B * f4                       # lengths
        + 2 * B * H * f4                   # c output block
        + 2 * B * H * f4                   # h/c scratch
        + t_tile * B * 4 * H * bf          # bf16 pre-gate scratch
        + t_tile * B * 4 * H * f4          # transient f32 matmul result
    )

    def rev(d, tt):                        # bwd direction walks tiles backwards
        return (1 - d) * tt + d * (nt - 1 - tt)

    y, c = pl.pallas_call(
        _bilstm_layer_kernel,
        out_shape=(
            jax.ShapeDtypeStruct((T, B, 2 * H), jnp.bfloat16),   # fwd|bwd halves
            jax.ShapeDtypeStruct((2, B, H), jnp.float32),        # per-direction cell
        ),
        grid=(2, nt),
        in_specs=[
            pl.BlockSpec((B, 1), lambda d, tt: (0, 0)),
            pl.BlockSpec((t_tile, B, Din), lambda d, tt: (rev(d, tt), 0, 0)),
            pl.BlockSpec((None, Din, 4 * H), lambda d, tt: (d, 0, 0)),
            pl.BlockSpec((None, H, 4 * H), lambda d, tt: (d, 0, 0)),
            pl.BlockSpec((None, 1, 4 * H), lambda d, tt: (d, 0, 0)),
        ],
        out_specs=(
            pl.BlockSpec((t_tile, B, H), lambda d, tt: (rev(d, tt), 0, d)),
            pl.BlockSpec((None, B, H), lambda d, tt: (d, 0, 0)),
        ),
        scratch_shapes=[
            pltpu.VMEM((B, H), jnp.float32),                 # h state (carried)
            pltpu.VMEM((B, H), jnp.float32),                 # c state (carried)
            pltpu.VMEM((t_tile, B, 4 * H), jnp.bfloat16),    # per-tile pre-gates
        ],
        compiler_params=pltpu.CompilerParams(
            dimension_semantics=("parallel", "arbitrary"),
            vmem_limit_bytes=_vmem_limit(vmem_need),
        ),
    )(lengths_col, x, wih, whh, bias)
    return y, c


# ---------------------------------------------------------------------------
# Encoder forward: embedding -> n_layers x bidirectional LSTM.
# Returns (src_encodings, cell), like the PyTorch module.
# ---------------------------------------------------------------------------
def encoder_forward(params, token_ids, lengths, t_tile=None):
    T, B = token_ids.shape
    x = embedding_lookup(token_ids, params["embedding"])          # (T, B, E) bf16
    lengths_col = lengths.reshape(B, 1).astype(jnp.int32)

    cells = []
    layer_in = x
    for wih, whh, bias in params["lstm"]:
        y, c = bilstm_layer(layer_in, lengths_col, wih, whh, bias, t_tile=t_tile)
        cells.append(c)                                           # (2, B, H)
        layer_in = y                                              # (T, B, 2H) bf16
        # TODO(synk): nn.LSTM inter-layer dropout is train-only; eval semantics here.

    src_encodings = layer_in                                      # (T, B, 2H) bf16
    cell = jnp.concatenate(cells, axis=0)                         # (2*L, B, H) f32
    return src_encodings, cell


# ---------------------------------------------------------------------------
# Parameter init (mirrors nn.Embedding / nn.LSTM defaults).
# Kernel layout: transposed, gate columns permuted (i,f,g,o)->(i,f,o,g), bf16.
# Raw layout kept for the pure-JAX reference.
# ---------------------------------------------------------------------------
def _permute_gate_cols(w):
    H = w.shape[-1] // 4
    return jnp.concatenate([w[..., :2 * H], w[..., 3 * H:], w[..., 2 * H:3 * H]],
                           axis=-1)


def init_params(key, vocab_size, embed_size, hidden_size, n_layers, pad_idx=0):
    k_emb, k_lstm = jax.random.split(key)
    emb = jax.random.normal(k_emb, (vocab_size, embed_size), jnp.float32)
    emb = emb.at[pad_idx].set(0.0)                                # padding_idx row
    bound = 1.0 / (hidden_size ** 0.5)
    H = hidden_size

    lstm_kernel, lstm_raw = [], []
    keys = jax.random.split(k_lstm, n_layers * 2 * 4)
    ki = 0
    for layer in range(n_layers):
        din = embed_size if layer == 0 else 2 * H
        wih_dirs, whh_dirs, b_dirs, raw_dirs = [], [], [], []
        for _d in range(2):
            w_ih = jax.random.uniform(keys[ki], (4 * H, din), jnp.float32,
                                      -bound, bound); ki += 1
            w_hh = jax.random.uniform(keys[ki], (4 * H, H), jnp.float32,
                                      -bound, bound); ki += 1
            b_ih = jax.random.uniform(keys[ki], (4 * H,), jnp.float32,
                                      -bound, bound); ki += 1
            b_hh = jax.random.uniform(keys[ki], (4 * H,), jnp.float32,
                                      -bound, bound); ki += 1
            w_ih_t, w_hh_t, b = w_ih.T, w_hh.T, (b_ih + b_hh)[None, :]
            raw_dirs.append((w_ih_t, w_hh_t, b))
            wih_dirs.append(_permute_gate_cols(w_ih_t))
            whh_dirs.append(_permute_gate_cols(w_hh_t))
            b_dirs.append(_permute_gate_cols(b))
        lstm_kernel.append((
            jnp.stack(wih_dirs).astype(jnp.bfloat16),   # (2, Din, 4H)
            jnp.stack(whh_dirs).astype(jnp.bfloat16),   # (2, H, 4H)
            jnp.stack(b_dirs),                          # (2, 1, 4H) f32
        ))
        lstm_raw.append(tuple(raw_dirs))
    return {"embedding": emb, "lstm": lstm_kernel, "lstm_raw": lstm_raw}


# ---------------------------------------------------------------------------
# Pure-JAX reference mirroring the kernel numerics (bf16 matmul operands,
# bf16 pre-gate storage, bf16 layer outputs), no Pallas.
# ---------------------------------------------------------------------------
def reference_forward(params, token_ids, lengths):
    T, B = token_ids.shape
    x = params["embedding"][token_ids].astype(jnp.bfloat16)
    mask = (jnp.arange(T)[:, None] < lengths[None, :])[:, :, None]   # (T,B,1)

    def run_dir(inp_b, w_ih_t, w_hh_t, bias, reverse):
        H = w_hh_t.shape[0]
        w_ih_b = w_ih_t.astype(jnp.bfloat16)
        w_hh_b = w_hh_t.astype(jnp.bfloat16)
        pre = jnp.einsum("tbd,dh->tbh", inp_b, w_ih_b,
                         preferred_element_type=jnp.float32).astype(jnp.bfloat16)
        h = jnp.zeros((B, H), jnp.float32)
        c = jnp.zeros((B, H), jnp.float32)
        ys = [None] * T
        order = range(T - 1, -1, -1) if reverse else range(T)
        for t in order:
            m = mask[t]
            g = (pre[t] + bias
                 + jnp.dot(h.astype(jnp.bfloat16), w_hh_b,
                           preferred_element_type=jnp.float32))
            i_g = jax.nn.sigmoid(g[:, 0 * H:1 * H])
            f_g = jax.nn.sigmoid(g[:, 1 * H:2 * H])
            g_g = jnp.tanh(g[:, 2 * H:3 * H])
            o_g = jax.nn.sigmoid(g[:, 3 * H:4 * H])
            c_new = f_g * c + i_g * g_g
            h_new = o_g * jnp.tanh(c_new)
            h = jnp.where(m, h_new, h)
            c = jnp.where(m, c_new, c)
            ys[t] = jnp.where(m, h_new, 0.0).astype(jnp.bfloat16)
        return jnp.stack(ys), c

    cells = []
    layer_in = x
    for layer in params["lstm_raw"]:
        outs = []
        for d, (w_ih_t, w_hh_t, b) in enumerate(layer):
            yd, c_n = run_dir(layer_in, w_ih_t, w_hh_t, b, reverse=(d == 1))
            outs.append(yd)
            cells.append(c_n)
        layer_in = jnp.concatenate(outs, axis=-1)
    return layer_in, jnp.stack(cells, axis=0)


if __name__ == "__main__":
    # (8,128)-aligned toy sizes: B multiple of 8, E/H multiples of 128, so all
    # stores are lane/sublane dense (per the perf review).
    VOCAB, EMBED, HIDDEN, LAYERS = 64, 128, 128, 2
    T, B, PAD = 8, 8, 0

    key = jax.random.PRNGKey(0)
    k_par, k_tok = jax.random.split(key)
    params = init_params(k_par, VOCAB, EMBED, HIDDEN, LAYERS, pad_idx=PAD)

    # Padded time-major ids + per-sentence lengths (what to_tensor yields);
    # lengths sorted descending, as pack_padded_sequence expects.
    lengths = jnp.array([8, 7, 6, 5, 5, 4, 3, 2], dtype=jnp.int32)
    tokens = jax.random.randint(k_tok, (T, B), 1, VOCAB, dtype=jnp.int32)
    pad_mask = jnp.arange(T)[:, None] < lengths[None, :]
    token_ids = jnp.where(pad_mask, tokens, PAD)

    src_encodings, cell = jax.block_until_ready(
        encoder_forward(params, token_ids, lengths, t_tile=4)   # 2 T-tiles/direction
    )
    assert src_encodings.shape == (T, B, 2 * HIDDEN)
    assert src_encodings.dtype == jnp.bfloat16
    assert cell.shape == (2 * LAYERS, B, HIDDEN)

    ref_enc, ref_cell = reference_forward(params, token_ids, lengths)
    # bf16-level tolerance: kernel and reference share the same bf16 rounding
    # points; residual diffs come from the fused tanh-based sigmoid identity.
    assert jnp.allclose(src_encodings.astype(jnp.float32),
                        ref_enc.astype(jnp.float32), atol=4e-3, rtol=4e-3)
    assert jnp.allclose(cell, ref_cell, atol=4e-3, rtol=4e-3)

    print("KERNEL_OK")
</pallas_src>

<mosaic_0001>
module attributes {stable_mosaic.version = 11 : i64} {
  func.func @_embed_gather_kernel(%arg0: i32, %arg1: memref<64xi32, #tpu.memory_space<smem>>, %arg2: memref<64x128xf32, #tpu.memory_space<any>>, %arg3: memref<1x8x128xbf16, #tpu.memory_space<vmem>>, %arg4: memref<8x128xf32, #tpu.memory_space<vmem>>, %arg5: memref<8x!tpu.dma_semaphore, #tpu.memory_space<semaphore_mem>>) attributes {dimension_semantics = [#tpu.dimension_semantics<parallel>], iteration_bounds = array<i64: 8>, scalar_prefetch = 1 : i64, scratch_operands = 2 : i64, tpu.core_type = #tpu.core_type<tc>, window_params = [{}, {transform_indices = @transform_1, window_bounds = array<i64: 1, 8, 128>}]} {
    %c8_i32 = arith.constant 8 : i32
    %0 = arith.muli %arg0, %c8_i32 : i32
    %c0_i32 = arith.constant 0 : i32
    %1 = arith.addi %0, %c0_i32 : i32
    %2 = arith.index_cast %1 : i32 to index
    %3 = memref.load %arg1[%2] : memref<64xi32, #tpu.memory_space<smem>>
    %c0_i32_0 = arith.constant 0 : i32
    %c63_i32 = arith.constant 63 : i32
    %4 = arith.maxsi %c0_i32_0, %3 : i32
    %5 = arith.minsi %c63_i32, %4 : i32
    %c0_i32_1 = arith.constant 0 : i32
    %c0_i32_2 = arith.constant 0 : i32
    %c0_i32_3 = arith.constant 0 : i32
    %6 = tpu.memref_slice %arg2[%5, %c0_i32_3] : memref<64x128xf32, #tpu.memory_space<any>> -> memref<1x128xf32, #tpu.memory_space<any>>
    %7 = tpu.memref_squeeze %6 : memref<1x128xf32, #tpu.memory_space<any>> -> memref<128xf32, #tpu.memory_space<any>>
    %c0_i32_4 = arith.constant 0 : i32
    %8 = tpu.memref_slice %arg4[%c0_i32_1, %c0_i32_4] : memref<8x128xf32, #tpu.memory_space<vmem>> -> memref<1x128xf32, #tpu.memory_space<vmem>>
    %9 = tpu.memref_squeeze %8 : memref<1x128xf32, #tpu.memory_space<vmem>> -> memref<128xf32, #tpu.memory_space<vmem>>
    %10 = tpu.memref_slice %arg5[%c0_i32_2] : memref<8x!tpu.dma_semaphore, #tpu.memory_space<semaphore_mem>> -> memref<1x!tpu.dma_semaphore, #tpu.memory_space<semaphore_mem>>
    %11 = tpu.memref_squeeze %10 : memref<1x!tpu.dma_semaphore, #tpu.memory_space<semaphore_mem>> -> memref<!tpu.dma_semaphore, #tpu.memory_space<semaphore_mem>>
    tpu.enqueue_dma source(%7 : memref<128xf32, #tpu.memory_space<any>>) target(%9 : memref<128xf32, #tpu.memory_space<vmem>>) target_semaphore(%11 : memref<!tpu.dma_semaphore, #tpu.memory_space<semaphore_mem>>)
    %c1_i32 = arith.constant 1 : i32
    %12 = arith.addi %0, %c1_i32 : i32
    %13 = arith.index_cast %12 : i32 to index
    %14 = memref.load %arg1[%13] : memref<64xi32, #tpu.memory_space<smem>>
    %c0_i32_5 = arith.constant 0 : i32
    %c63_i32_6 = arith.constant 63 : i32
    %15 = arith.maxsi %c0_i32_5, %14 : i32
    %16 = arith.minsi %c63_i32_6, %15 : i32
    %c1_i32_7 = arith.constant 1 : i32
    %c1_i32_8 = arith.constant 1 : i32
    %c0_i32_9 = arith.constant 0 : i32
    %17 = tpu.memref_slice %arg2[%16, %c0_i32_9] : memref<64x128xf32, #tpu.memory_space<any>> -> memref<1x128xf32, #tpu.memory_space<any>>
    %18 = tpu.memref_squeeze %17 : memref<1x128xf32, #tpu.memory_space<any>> -> memref<128xf32, #tpu.memory_space<any>>
    %c0_i32_10 = arith.constant 0 : i32
    %19 = tpu.memref_slice %arg4[%c1_i32_7, %c0_i32_10] : memref<8x128xf32, #tpu.memory_space<vmem>> -> memref<1x128xf32, #tpu.memory_space<vmem>>
    %20 = tpu.memref_squeeze %19 : memref<1x128xf32, #tpu.memory_space<vmem>> -> memref<128xf32, #tpu.memory_space<vmem>>
    %21 = tpu.memref_slice %arg5[%c1_i32_8] : memref<8x!tpu.dma_semaphore, #tpu.memory_space<semaphore_mem>> -> memref<1x!tpu.dma_semaphore, #tpu.memory_space<semaphore_mem>>
    %22 = tpu.memref_squeeze %21 : memref<1x!tpu.dma_semaphore, #tpu.memory_space<semaphore_mem>> -> memref<!tpu.dma_semaphore, #tpu.memory_space<semaphore_mem>>
    tpu.enqueue_dma source(%18 : memref<128xf32, #tpu.memory_space<any>>) target(%20 : memref<128xf32, #tpu.memory_space<vmem>>) target_semaphore(%22 : memref<!tpu.dma_semaphore, #tpu.memory_space<semaphore_mem>>)
    %c2_i32 = arith.constant 2 : i32
    %23 = arith.addi %0, %c2_i32 : i32
    %24 = arith.index_cast %23 : i32 to index
    %25 = memref.load %arg1[%24] : memref<64xi32, #tpu.memory_space<smem>>
    %c0_i32_11 = arith.constant 0 : i32
    %c63_i32_12 = arith.constant 63 : i32
    %26 = arith.maxsi %c0_i32_11, %25 : i32
    %27 = arith.minsi %c63_i32_12, %26 : i32
    %c2_i32_13 = arith.constant 2 : i32
    %c2_i32_14 = arith.constant 2 : i32
    %c0_i32_15 = arith.constant 0 : i32
    %28 = tpu.memref_slice %arg2[%27, %c0_i32_15] : memref<64x128xf32, #tpu.memory_space<any>> -> memref<1x128xf32, #tpu.memory_space<any>>
    %29 = tpu.memref_squeeze %28 : memref<1x128xf32, #tpu.memory_space<any>> -> memref<128xf32, #tpu.memory_space<any>>
    %c0_i32_16 = arith.constant 0 : i32
    %30 = tpu.memref_slice %arg4[%c2_i32_13, %c0_i32_16] : memref<8x128xf32, #tpu.memory_space<vmem>> -> memref<1x128xf32, #tpu.memory_space<vmem>>
    %31 = tpu.memref_squeeze %30 : memref<1x128xf32, #tpu.memory_space<vmem>> -> memref<128xf32, #tpu.memory_space<vmem>>
    %32 = tpu.memref_slice %arg5[%c2_i32_14] : memref<8x!tpu.dma_semaphore, #tpu.memory_space<semaphore_mem>> -> memref<1x!tpu.dma_semaphore, #tpu.memory_space<semaphore_mem>>
    %33 = tpu.memref_squeeze %32 : memref<1x!tpu.dma_semaphore, #tpu.memory_space<semaphore_mem>> -> memref<!tpu.dma_semaphore, #tpu.memory_space<semaphore_mem>>
    tpu.enqueue_dma source(%29 : memref<128xf32, #tpu.memory_space<any>>) target(%31 : memref<128xf32, #tpu.memory_space<vmem>>) target_semaphore(%33 : memref<!tpu.dma_semaphore, #tpu.memory_space<semaphore_mem>>)
    %c3_i32 = arith.constant 3 : i32
    %34 = arith.addi %0, %c3_i32 : i32
    %35 = arith.index_cast %34 : i32 to index
    %36 = memref.load %arg1[%35] : memref<64xi32, #tpu.memory_space<smem>>
    %c0_i32_17 = arith.constant 0 : i32
    %c63_i32_18 = arith.constant 63 : i32
    %37 = arith.maxsi %c0_i32_17, %36 : i32
    %38 = arith.minsi %c63_i32_18, %37 : i32
    %c3_i32_19 = arith.constant 3 : i32
    %c3_i32_20 = arith.constant 3 : i32
    %c0_i32_21 = arith.constant 0 : i32
    %39 = tpu.memref_slice %arg2[%38, %c0_i32_21] : memref<64x128xf32, #tpu.memory_space<any>> -> memref<1x128xf32, #tpu.memory_space<any>>
    %40 = tpu.memref_squeeze %39 : memref<1x128xf32, #tpu.memory_space<any>> -> memref<128xf32, #tpu.memory_space<any>>
    %c0_i32_22 = arith.constant 0 : i32
    %41 = tpu.memref_slice %arg4[%c3_i32_19, %c0_i32_22] : memref<8x128xf32, #tpu.memory_space<vmem>> -> memref<1x128xf32, #tpu.memory_space<vmem>>
    %42 = tpu.memref_squeeze %41 : memref<1x128xf32, #tpu.memory_space<vmem>> -> memref<128xf32, #tpu.memory_space<vmem>>
    %43 = tpu.memref_slice %arg5[%c3_i32_20] : memref<8x!tpu.dma_semaphore, #tpu.memory_space<semaphore_mem>> -> memref<1x!tpu.dma_semaphore, #tpu.memory_space<semaphore_mem>>
    %44 = tpu.memref_squeeze %43 : memref<1x!tpu.dma_semaphore, #tpu.memory_space<semaphore_mem>> -> memref<!tpu.dma_semaphore, #tpu.memory_space<semaphore_mem>>
    tpu.enqueue_dma source(%40 : memref<128xf32, #tpu.memory_space<any>>) target(%42 : memref<128xf32, #tpu.memory_space<vmem>>) target_semaphore(%44 : memref<!tpu.dma_semaphore, #tpu.memory_space<semaphore_mem>>)
    %c4_i32 = arith.constant 4 : i32
    %45 = arith.addi %0, %c4_i32 : i32
    %46 = arith.index_cast %45 : i32 to index
    %47 = memref.load %arg1[%46] : memref<64xi32, #tpu.memory_space<smem>>
    %c0_i32_23 = arith.constant 0 : i32
    %c63_i32_24 = arith.constant 63 : i32
    %48 = arith.maxsi %c0_i32_23, %47 : i32
    %49 = arith.minsi %c63_i32_24, %48 : i32
    %c4_i32_25 = arith.constant 4 : i32
    %c4_i32_26 = arith.constant 4 : i32
    %c0_i32_27 = arith.constant 0 : i32
    %50 = tpu.memref_slice %arg2[%49, %c0_i32_27] : memref<64x128xf32, #tpu.memory_space<any>> -> memref<1x128xf32, #tpu.memory_space<any>>
    %51 = tpu.memref_squeeze %50 : memref<1x128xf32, #tpu.memory_space<any>> -> memref<128xf32, #tpu.memory_space<any>>
    %c0_i32_28 = arith.constant 0 : i32
    %52 = tpu.memref_slice %arg4[%c4_i32_25, %c0_i32_28] : memref<8x128xf32, #tpu.memory_space<vmem>> -> memref<1x128xf32, #tpu.memory_space<vmem>>
    %53 = tpu.memref_squeeze %52 : memref<1x128xf32, #tpu.memory_space<vmem>> -> memref<128xf32, #tpu.memory_space<vmem>>
    %54 = tpu.memref_slice %arg5[%c4_i32_26] : memref<8x!tpu.dma_semaphore, #tpu.memory_space<semaphore_mem>> -> memref<1x!tpu.dma_semaphore, #tpu.memory_space<semaphore_mem>>
    %55 = tpu.memref_squeeze %54 : memref<1x!tpu.dma_semaphore, #tpu.memory_space<semaphore_mem>> -> memref<!tpu.dma_semaphore, #tpu.memory_space<semaphore_mem>>
    tpu.enqueue_dma source(%51 : memref<128xf32, #tpu.memory_space<any>>) target(%53 : memref<128xf32, #tpu.memory_space<vmem>>) target_semaphore(%55 : memref<!tpu.dma_semaphore, #tpu.memory_space<semaphore_mem>>)
    %c5_i32 = arith.constant 5 : i32
    %56 = arith.addi %0, %c5_i32 : i32
    %57 = arith.index_cast %56 : i32 to index
    %58 = memref.load %arg1[%57] : memref<64xi32, #tpu.memory_space<smem>>
    %c0_i32_29 = arith.constant 0 : i32
    %c63_i32_30 = arith.constant 63 : i32
    %59 = arith.maxsi %c0_i32_29, %58 : i32
    %60 = arith.minsi %c63_i32_30, %59 : i32
    %c5_i32_31 = arith.constant 5 : i32
    %c5_i32_32 = arith.constant 5 : i32
    %c0_i32_33 = arith.constant 0 : i32
    %61 = tpu.memref_slice %arg2[%60, %c0_i32_33] : memref<64x128xf32, #tpu.memory_space<any>> -> memref<1x128xf32, #tpu.memory_space<any>>
    %62 = tpu.memref_squeeze %61 : memref<1x128xf32, #tpu.memory_space<any>> -> memref<128xf32, #tpu.memory_space<any>>
    %c0_i32_34 = arith.constant 0 : i32
    %63 = tpu.memref_slice %arg4[%c5_i32_31, %c0_i32_34] : memref<8x128xf32, #tpu.memory_space<vmem>> -> memref<1x128xf32, #tpu.memory_space<vmem>>
    %64 = tpu.memref_squeeze %63 : memref<1x128xf32, #tpu.memory_space<vmem>> -> memref<128xf32, #tpu.memory_space<vmem>>
    %65 = tpu.memref_slice %arg5[%c5_i32_32] : memref<8x!tpu.dma_semaphore, #tpu.memory_space<semaphore_mem>> -> memref<1x!tpu.dma_semaphore, #tpu.memory_space<semaphore_mem>>
    %66 = tpu.memref_squeeze %65 : memref<1x!tpu.dma_semaphore, #tpu.memory_space<semaphore_mem>> -> memref<!tpu.dma_semaphore, #tpu.memory_space<semaphore_mem>>
    tpu.enqueue_dma source(%62 : memref<128xf32, #tpu.memory_space<any>>) target(%64 : memref<128xf32, #tpu.memory_space<vmem>>) target_semaphore(%66 : memref<!tpu.dma_semaphore, #tpu.memory_space<semaphore_mem>>)
    %c6_i32 = arith.constant 6 : i32
    %67 = arith.addi %0, %c6_i32 : i32
    %68 = arith.index_cast %67 : i32 to index
    %69 = memref.load %arg1[%68] : memref<64xi32, #tpu.memory_space<smem>>
    %c0_i32_35 = arith.constant 0 : i32
    %c63_i32_36 = arith.constant 63 : i32
    %70 = arith.maxsi %c0_i32_35, %69 : i32
    %71 = arith.minsi %c63_i32_36, %70 : i32
    %c6_i32_37 = arith.constant 6 : i32
    %c6_i32_38 = arith.constant 6 : i32
    %c0_i32_39 = arith.constant 0 : i32
    %72 = tpu.memref_slice %arg2[%71, %c0_i32_39] : memref<64x128xf32, #tpu.memory_space<any>> -> memref<1x128xf32, #tpu.memory_space<any>>
    %73 = tpu.memref_squeeze %72 : memref<1x128xf32, #tpu.memory_space<any>> -> memref<128xf32, #tpu.memory_space<any>>
    %c0_i32_40 = arith.constant 0 : i32
    %74 = tpu.memref_slice %arg4[%c6_i32_37, %c0_i32_40] : memref<8x128xf32, #tpu.memory_space<vmem>> -> memref<1x128xf32, #tpu.memory_space<vmem>>
    %75 = tpu.memref_squeeze %74 : memref<1x128xf32, #tpu.memory_space<vmem>> -> memref<128xf32, #tpu.memory_space<vmem>>
    %76 = tpu.memref_slice %arg5[%c6_i32_38] : memref<8x!tpu.dma_semaphore, #tpu.memory_space<semaphore_mem>> -> memref<1x!tpu.dma_semaphore, #tpu.memory_space<semaphore_mem>>
    %77 = tpu.memref_squeeze %76 : memref<1x!tpu.dma_semaphore, #tpu.memory_space<semaphore_mem>> -> memref<!tpu.dma_semaphore, #tpu.memory_space<semaphore_mem>>
    tpu.enqueue_dma source(%73 : memref<128xf32, #tpu.memory_space<any>>) target(%75 : memref<128xf32, #tpu.memory_space<vmem>>) target_semaphore(%77 : memref<!tpu.dma_semaphore, #tpu.memory_space<semaphore_mem>>)
    %c7_i32 = arith.constant 7 : i32
    %78 = arith.addi %0, %c7_i32 : i32
    %79 = arith.index_cast %78 : i32 to index
    %80 = memref.load %arg1[%79] : memref<64xi32, #tpu.memory_space<smem>>
    %c0_i32_41 = arith.constant 0 : i32
    %c63_i32_42 = arith.constant 63 : i32
    %81 = arith.maxsi %c0_i32_41, %80 : i32
    %82 = arith.minsi %c63_i32_42, %81 : i32
    %c7_i32_43 = arith.constant 7 : i32
    %c7_i32_44 = arith.constant 7 : i32
    %c0_i32_45 = arith.constant 0 : i32
    %83 = tpu.memref_slice %arg2[%82, %c0_i32_45] : memref<64x128xf32, #tpu.memory_space<any>> -> memref<1x128xf32, #tpu.memory_space<any>>
    %84 = tpu.memref_squeeze %83 : memref<1x128xf32, #tpu.memory_space<any>> -> memref<128xf32, #tpu.memory_space<any>>
    %c0_i32_46 = arith.constant 0 : i32
    %85 = tpu.memref_slice %arg4[%c7_i32_43, %c0_i32_46] : memref<8x128xf32, #tpu.memory_space<vmem>> -> memref<1x128xf32, #tpu.memory_space<vmem>>
    %86 = tpu.memref_squeeze %85 : memref<1x128xf32, #tpu.memory_space<vmem>> -> memref<128xf32, #tpu.memory_space<vmem>>
    %87 = tpu.memref_slice %arg5[%c7_i32_44] : memref<8x!tpu.dma_semaphore, #tpu.memory_space<semaphore_mem>> -> memref<1x!tpu.dma_semaphore, #tpu.memory_space<semaphore_mem>>
    %88 = tpu.memref_squeeze %87 : memref<1x!tpu.dma_semaphore, #tpu.memory_space<semaphore_mem>> -> memref<!tpu.dma_semaphore, #tpu.memory_space<semaphore_mem>>
    tpu.enqueue_dma source(%84 : memref<128xf32, #tpu.memory_space<any>>) target(%86 : memref<128xf32, #tpu.memory_space<vmem>>) target_semaphore(%88 : memref<!tpu.dma_semaphore, #tpu.memory_space<semaphore_mem>>)
    %c0_i32_47 = arith.constant 0 : i32
    %c0_i32_48 = arith.constant 0 : i32
    %c0_i32_49 = arith.constant 0 : i32
    %c0_i32_50 = arith.constant 0 : i32
    %89 = tpu.memref_slice %arg2[%c0_i32_47, %c0_i32_50] : memref<64x128xf32, #tpu.memory_space<any>> -> memref<1x128xf32, #tpu.memory_space<any>>
    %90 = tpu.memref_squeeze %89 : memref<1x128xf32, #tpu.memory_space<any>> -> memref<128xf32, #tpu.memory_space<any>>
    %c0_i32_51 = arith.constant 0 : i32
    %91 = tpu.memref_slice %arg4[%c0_i32_48, %c0_i32_51] : memref<8x128xf32, #tpu.memory_space<vmem>> -> memref<1x128xf32, #tpu.memory_space<vmem>>
    %92 = tpu.memref_squeeze %91 : memref<1x128xf32, #tpu.memory_space<vmem>> -> memref<128xf32, #tpu.memory_space<vmem>>
    %93 = tpu.memref_slice %arg5[%c0_i32_49] : memref<8x!tpu.dma_semaphore, #tpu.memory_space<semaphore_mem>> -> memref<1x!tpu.dma_semaphore, #tpu.memory_space<semaphore_mem>>
    %94 = tpu.memref_squeeze %93 : memref<1x!tpu.dma_semaphore, #tpu.memory_space<semaphore_mem>> -> memref<!tpu.dma_semaphore, #tpu.memory_space<semaphore_mem>>
    tpu.wait_dma2 semaphore(%94 : memref<!tpu.dma_semaphore, #tpu.memory_space<semaphore_mem>>) src(%90 : memref<128xf32, #tpu.memory_space<any>>) dst(%92 : memref<128xf32, #tpu.memory_space<vmem>>)
    %c0_i32_52 = arith.constant 0 : i32
    %c1_i32_53 = arith.constant 1 : i32
    %c1_i32_54 = arith.constant 1 : i32
    %c0_i32_55 = arith.constant 0 : i32
    %95 = tpu.memref_slice %arg2[%c0_i32_52, %c0_i32_55] : memref<64x128xf32, #tpu.memory_space<any>> -> memref<1x128xf32, #tpu.memory_space<any>>
    %96 = tpu.memref_squeeze %95 : memref<1x128xf32, #tpu.memory_space<any>> -> memref<128xf32, #tpu.memory_space<any>>
    %c0_i32_56 = arith.constant 0 : i32
    %97 = tpu.memref_slice %arg4[%c1_i32_53, %c0_i32_56] : memref<8x128xf32, #tpu.memory_space<vmem>> -> memref<1x128xf32, #tpu.memory_space<vmem>>
    %98 = tpu.memref_squeeze %97 : memref<1x128xf32, #tpu.memory_space<vmem>> -> memref<128xf32, #tpu.memory_space<vmem>>
    %99 = tpu.memref_slice %arg5[%c1_i32_54] : memref<8x!tpu.dma_semaphore, #tpu.memory_space<semaphore_mem>> -> memref<1x!tpu.dma_semaphore, #tpu.memory_space<semaphore_mem>>
    %100 = tpu.memref_squeeze %99 : memref<1x!tpu.dma_semaphore, #tpu.memory_space<semaphore_mem>> -> memref<!tpu.dma_semaphore, #tpu.memory_space<semaphore_mem>>
    tpu.wait_dma2 semaphore(%100 : memref<!tpu.dma_semaphore, #tpu.memory_space<semaphore_mem>>) src(%96 : memref<128xf32, #tpu.memory_space<any>>) dst(%98 : memref<128xf32, #tpu.memory_space<vmem>>)
    %c0_i32_57 = arith.constant 0 : i32
    %c2_i32_58 = arith.constant 2 : i32
    %c2_i32_59 = arith.constant 2 : i32
    %c0_i32_60 = arith.constant 0 : i32
    %101 = tpu.memref_slice %arg2[%c0_i32_57, %c0_i32_60] : memref<64x128xf32, #tpu.memory_space<any>> -> memref<1x128xf32, #tpu.memory_space<any>>
    %102 = tpu.memref_squeeze %101 : memref<1x128xf32, #tpu.memory_space<any>> -> memref<128xf32, #tpu.memory_space<any>>
    %c0_i32_61 = arith.constant 0 : i32
    %103 = tpu.memref_slice %arg4[%c2_i32_58, %c0_i32_61] : memref<8x128xf32, #tpu.memory_space<vmem>> -> memref<1x128xf32, #tpu.memory_space<vmem>>
    %104 = tpu.memref_squeeze %103 : memref<1x128xf32, #tpu.memory_space<vmem>> -> memref<128xf32, #tpu.memory_space<vmem>>
    %105 = tpu.memref_slice %arg5[%c2_i32_59] : memref<8x!tpu.dma_semaphore, #tpu.memory_space<semaphore_mem>> -> memref<1x!tpu.dma_semaphore, #tpu.memory_space<semaphore_mem>>
    %106 = tpu.memref_squeeze %105 : memref<1x!tpu.dma_semaphore, #tpu.memory_space<semaphore_mem>> -> memref<!tpu.dma_semaphore, #tpu.memory_space<semaphore_mem>>
    tpu.wait_dma2 semaphore(%106 : memref<!tpu.dma_semaphore, #tpu.memory_space<semaphore_mem>>) src(%102 : memref<128xf32, #tpu.memory_space<any>>) dst(%104 : memref<128xf32, #tpu.memory_space<vmem>>)
    %c0_i32_62 = arith.constant 0 : i32
    %c3_i32_63 = arith.constant 3 : i32
    %c3_i32_64 = arith.constant 3 : i32
    %c0_i32_65 = arith.constant 0 : i32
    %107 = tpu.memref_slice %arg2[%c0_i32_62, %c0_i32_65] : memref<64x128xf32, #tpu.memory_space<any>> -> memref<1x128xf32, #tpu.memory_space<any>>
    %108 = tpu.memref_squeeze %107 : memref<1x128xf32, #tpu.memory_space<any>> -> memref<128xf32, #tpu.memory_space<any>>
    %c0_i32_66 = arith.constant 0 : i32
    %109 = tpu.memref_slice %arg4[%c3_i32_63, %c0_i32_66] : memref<8x128xf32, #tpu.memory_space<vmem>> -> memref<1x128xf32, #tpu.memory_space<vmem>>
    %110 = tpu.memref_squeeze %109 : memref<1x128xf32, #tpu.memory_space<vmem>> -> memref<128xf32, #tpu.memory_space<vmem>>
    %111 = tpu.memref_slice %arg5[%c3_i32_64] : memref<8x!tpu.dma_semaphore, #tpu.memory_space<semaphore_mem>> -> memref<1x!tpu.dma_semaphore, #tpu.memory_space<semaphore_mem>>
    %112 = tpu.memref_squeeze %111 : memref<1x!tpu.dma_semaphore, #tpu.memory_space<semaphore_mem>> -> memref<!tpu.dma_semaphore, #tpu.memory_space<semaphore_mem>>
    tpu.wait_dma2 semaphore(%112 : memref<!tpu.dma_semaphore, #tpu.memory_space<semaphore_mem>>) src(%108 : memref<128xf32, #tpu.memory_space<any>>) dst(%110 : memref<128xf32, #tpu.memory_space<vmem>>)
    %c0_i32_67 = arith.constant 0 : i32
    %c4_i32_68 = arith.constant 4 : i32
    %c4_i32_69 = arith.constant 4 : i32
    %c0_i32_70 = arith.constant 0 : i32
    %113 = tpu.memref_slice %arg2[%c0_i32_67, %c0_i32_70] : memref<64x128xf32, #tpu.memory_space<any>> -> memref<1x128xf32, #tpu.memory_space<any>>
    %114 = tpu.memref_squeeze %113 : memref<1x128xf32, #tpu.memory_space<any>> -> memref<128xf32, #tpu.memory_space<any>>
    %c0_i32_71 = arith.constant 0 : i32
    %115 = tpu.memref_slice %arg4[%c4_i32_68, %c0_i32_71] : memref<8x128xf32, #tpu.memory_space<vmem>> -> memref<1x128xf32, #tpu.memory_space<vmem>>
    %116 = tpu.memref_squeeze %115 : memref<1x128xf32, #tpu.memory_space<vmem>> -> memref<128xf32, #tpu.memory_space<vmem>>
    %117 = tpu.memref_slice %arg5[%c4_i32_69] : memref<8x!tpu.dma_semaphore, #tpu.memory_space<semaphore_mem>> -> memref<1x!tpu.dma_semaphore, #tpu.memory_space<semaphore_mem>>
    %118 = tpu.memref_squeeze %117 : memref<1x!tpu.dma_semaphore, #tpu.memory_space<semaphore_mem>> -> memref<!tpu.dma_semaphore, #tpu.memory_space<semaphore_mem>>
    tpu.wait_dma2 semaphore(%118 : memref<!tpu.dma_semaphore, #tpu.memory_space<semaphore_mem>>) src(%114 : memref<128xf32, #tpu.memory_space<any>>) dst(%116 : memref<128xf32, #tpu.memory_space<vmem>>)
    %c0_i32_72 = arith.constant 0 : i32
    %c5_i32_73 = arith.constant 5 : i32
    %c5_i32_74 = arith.constant 5 : i32
    %c0_i32_75 = arith.constant 0 : i32
    %119 = tpu.memref_slice %arg2[%c0_i32_72, %c0_i32_75] : memref<64x128xf32, #tpu.memory_space<any>> -> memref<1x128xf32, #tpu.memory_space<any>>
    %120 = tpu.memref_squeeze %119 : memref<1x128xf32, #tpu.memory_space<any>> -> memref<128xf32, #tpu.memory_space<any>>
    %c0_i32_76 = arith.constant 0 : i32
    %121 = tpu.memref_slice %arg4[%c5_i32_73, %c0_i32_76] : memref<8x128xf32, #tpu.memory_space<vmem>> -> memref<1x128xf32, #tpu.memory_space<vmem>>
    %122 = tpu.memref_squeeze %121 : memref<1x128xf32, #tpu.memory_space<vmem>> -> memref<128xf32, #tpu.memory_space<vmem>>
    %123 = tpu.memref_slice %arg5[%c5_i32_74] : memref<8x!tpu.dma_semaphore, #tpu.memory_space<semaphore_mem>> -> memref<1x!tpu.dma_semaphore, #tpu.memory_space<semaphore_mem>>
    %124 = tpu.memref_squeeze %123 : memref<1x!tpu.dma_semaphore, #tpu.memory_space<semaphore_mem>> -> memref<!tpu.dma_semaphore, #tpu.memory_space<semaphore_mem>>
    tpu.wait_dma2 semaphore(%124 : memref<!tpu.dma_semaphore, #tpu.memory_space<semaphore_mem>>) src(%120 : memref<128xf32, #tpu.memory_space<any>>) dst(%122 : memref<128xf32, #tpu.memory_space<vmem>>)
    %c0_i32_77 = arith.constant 0 : i32
    %c6_i32_78 = arith.constant 6 : i32
    %c6_i32_79 = arith.constant 6 : i32
    %c0_i32_80 = arith.constant 0 : i32
    %125 = tpu.memref_slice %arg2[%c0_i32_77, %c0_i32_80] : memref<64x128xf32, #tpu.memory_space<any>> -> memref<1x128xf32, #tpu.memory_space<any>>
    %126 = tpu.memref_squeeze %125 : memref<1x128xf32, #tpu.memory_space<any>> -> memref<128xf32, #tpu.memory_space<any>>
    %c0_i32_81 = arith.constant 0 : i32
    %127 = tpu.memref_slice %arg4[%c6_i32_78, %c0_i32_81] : memref<8x128xf32, #tpu.memory_space<vmem>> -> memref<1x128xf32, #tpu.memory_space<vmem>>
    %128 = tpu.memref_squeeze %127 : memref<1x128xf32, #tpu.memory_space<vmem>> -> memref<128xf32, #tpu.memory_space<vmem>>
    %129 = tpu.memref_slice %arg5[%c6_i32_79] : memref<8x!tpu.dma_semaphore, #tpu.memory_space<semaphore_mem>> -> memref<1x!tpu.dma_semaphore, #tpu.memory_space<semaphore_mem>>
    %130 = tpu.memref_squeeze %129 : memref<1x!tpu.dma_semaphore, #tpu.memory_space<semaphore_mem>> -> memref<!tpu.dma_semaphore, #tpu.memory_space<semaphore_mem>>
    tpu.wait_dma2 semaphore(%130 : memref<!tpu.dma_semaphore, #tpu.memory_space<semaphore_mem>>) src(%126 : memref<128xf32, #tpu.memory_space<any>>) dst(%128 : memref<128xf32, #tpu.memory_space<vmem>>)
    %c0_i32_82 = arith.constant 0 : i32
    %c7_i32_83 = arith.constant 7 : i32
    %c7_i32_84 = arith.constant 7 : i32
    %c0_i32_85 = arith.constant 0 : i32
    %131 = tpu.memref_slice %arg2[%c0_i32_82, %c0_i32_85] : memref<64x128xf32, #tpu.memory_space<any>> -> memref<1x128xf32, #tpu.memory_space<any>>
    %132 = tpu.memref_squeeze %131 : memref<1x128xf32, #tpu.memory_space<any>> -> memref<128xf32, #tpu.memory_space<any>>
    %c0_i32_86 = arith.constant 0 : i32
    %133 = tpu.memref_slice %arg4[%c7_i32_83, %c0_i32_86] : memref<8x128xf32, #tpu.memory_space<vmem>> -> memref<1x128xf32, #tpu.memory_space<vmem>>
    %134 = tpu.memref_squeeze %133 : memref<1x128xf32, #tpu.memory_space<vmem>> -> memref<128xf32, #tpu.memory_space<vmem>>
    %135 = tpu.memref_slice %arg5[%c7_i32_84] : memref<8x!tpu.dma_semaphore, #tpu.memory_space<semaphore_mem>> -> memref<1x!tpu.dma_semaphore, #tpu.memory_space<semaphore_mem>>
    %136 = tpu.memref_squeeze %135 : memref<1x!tpu.dma_semaphore, #tpu.memory_space<semaphore_mem>> -> memref<!tpu.dma_semaphore, #tpu.memory_space<semaphore_mem>>
    tpu.wait_dma2 semaphore(%136 : memref<!tpu.dma_semaphore, #tpu.memory_space<semaphore_mem>>) src(%132 : memref<128xf32, #tpu.memory_space<any>>) dst(%134 : memref<128xf32, #tpu.memory_space<vmem>>)
    %c0 = arith.constant 0 : index
    %c0_87 = arith.constant 0 : index
    %137 = vector.load %arg4[%c0, %c0_87] : memref<8x128xf32, #tpu.memory_space<vmem>>, vector<8x128xf32>
    %138 = arith.truncf %137 : vector<8x128xf32> to vector<8x128xbf16>
    %c0_88 = arith.constant 0 : index
    %c0_89 = arith.constant 0 : index
    %c0_90 = arith.constant 0 : index
    %139 = vector.load %arg3[%c0_88, %c0_89, %c0_90] : memref<1x8x128xbf16, #tpu.memory_space<vmem>>, vector<1x8x128xbf16>
    %140 = vector.shape_cast %139 : vector<1x8x128xbf16> to vector<8x128xbf16>
    %141 = vector.shape_cast %138 : vector<8x128xbf16> to vector<1x8x128xbf16>
    tpu.vector_store %arg3[%c0_88, %c0_89, %c0_90], %141 {strides = array<i32>} : memref<1x8x128xbf16, #tpu.memory_space<vmem>>, vector<1x8x128xbf16>,
    return
  }
  func.func @transform_1(%arg0: i32, %arg1: memref<64xi32, #tpu.memory_space<smem>>) -> (i32, i32, i32) {
    %c0_i32 = arith.constant 0 : i32
    %c0_i32_0 = arith.constant 0 : i32
    %c0_i32_1 = arith.constant 0 : i32
    return %arg0, %c0_i32, %c0_i32_0 : i32, i32, i32
  }
}

</mosaic_0001>

<llo_original>
// kernel: tpu_custom_call.1
$region0: #{tpu_custom_call.1}
  #allocation0 [shape = 'u32[]', space=smem, size = 0x4, offset = 0x4, fixed_abs, tag = 'smem constant byte address 0x4 - core index']
  #allocation1 [shape = 'u32[144,128]{1,0:T(1,128)}', space=vmem, size = 0x12000, scoped, tag = 'internal scratch']
  #allocation2 [shape = 'f32[8,128]{1,0:T(8,128)}', space=vmem, size = 0x1000, scoped, tag = 'scratch operand']
  #allocation3 [shape = 's32[8]{0}', space=sflag, size = 0x20, scoped, tag = 'scratch operand']
  #allocation4 [shape = 's32[1]{0}', space=sflag, size = 0x4, scoped, tag = 'scoped memory for tpu_custom_call.1']
  #allocation5 [shape = 'u8[512]{0}', space=smem, size = 0x200, scoped, tag = 'prefetched SMEM operand 0']
  #allocation8 [shape = 's32[]', space=sflag, size = 0x4, offset = 0, fixed_abs, tag = 'sflag constant byte address 0x0 - dummy sync flag']
  #allocation9 [shape = 's32[]', space=sflag, size = 0x4, offset = 0, fixed_abs, tag = 'sflag constant byte address 0x0 - dummy sync flag']
  #allocation10 [shape = 'u32[]', space=smem, size = 0x4, offset = 0x44, fixed_abs, tag = 'smem constant byte address 0x44 - assertion arg 0']
  #allocation11 [shape = 'u32[]', space=smem, size = 0x4, offset = 0x48, fixed_abs, tag = 'smem constant byte address 0x48 - assertion arg 1']
  #allocation12 [shape = 's32[]', space=sflag, size = 0x4, offset = 0, fixed_abs, tag = 'sflag constant byte address 0x0 - dummy sync flag']
  #allocation13 [shape = 's32[]', space=sflag, size = 0x4, offset = 0, fixed_abs, tag = 'sflag constant byte address 0x0 - dummy sync flag']
  #allocation14 [shape = 's32[]', space=sflag, size = 0x4, offset = 0, fixed_abs, tag = 'sflag constant byte address 0x0 - dummy sync flag']
  #allocation15 [shape = 's32[]', space=sflag, size = 0x4, offset = 0, fixed_abs, tag = 'sflag constant byte address 0x0 - dummy sync flag']
  #allocation16 [shape = 's32[]', space=sflag, size = 0x4, offset = 0, fixed_abs, tag = 'sflag constant byte address 0x0 - dummy sync flag']
  #allocation17 [shape = 's32[]', space=sflag, size = 0x4, offset = 0, fixed_abs, tag = 'sflag constant byte address 0x0 - dummy sync flag']
  #allocation18 [shape = 's32[]', space=sflag, size = 0x4, offset = 0, fixed_abs, tag = 'sflag constant byte address 0x0 - dummy sync flag']
  #allocation19 [shape = 's32[]', space=sflag, size = 0x4, offset = 0, fixed_abs, tag = 'sflag constant byte address 0x0 - dummy sync flag']
  #allocation20 [shape = 's32[]', space=sflag, size = 0x4, offset = 0, fixed_abs, tag = 'sflag constant byte address 0x0 - dummy sync flag']
  #allocation21 [shape = 's32[]', space=sflag, size = 0x4, offset = 0, fixed_abs, tag = 'sflag constant byte address 0x0 - dummy sync flag']
  #allocation22 [shape = 's32[]', space=sflag, size = 0x4, offset = 0, fixed_abs, tag = 'sflag constant byte address 0x0 - dummy sync flag']
  #allocation23 [shape = 's32[]', space=sflag, size = 0x4, offset = 0, fixed_abs, tag = 'sflag constant byte address 0x0 - dummy sync flag']
  #allocation24 [shape = 's32[]', space=sflag, size = 0x4, offset = 0, fixed_abs, tag = 'sflag constant byte address 0x0 - dummy sync flag']
  #allocation25 [shape = 's32[]', space=sflag, size = 0x4, offset = 0, fixed_abs, tag = 'sflag constant byte address 0x0 - dummy sync flag']
  %s0 = inlined_call_operand.hbm [shape: s32[64], index: 0, kind: input, shape index: {}]
  %s1 = inlined_call_operand.hbm [shape: f32[64,128], index: 1, kind: input, shape index: {}]
  %s2 = inlined_call_operand.hbm [shape: bf16[8,8,128], index: 2, kind: output, shape index: {}]
  %s3 = sld [smem:[#allocation0]]
  $region57: #{tpu_custom_call.1} parent=0
    _
  %s5 = ssub.s32 1, %s3
  %s6 = scalar_select 0, %s5, %s3
  %8 = dma.hbm_to_smem %s0, 16, [#allocation5], [#allocation4]
  %9 = dma.done [#allocation4], 16
  %10 = sfence
  $region1: #{tpu_custom_call.1} parent=0
    #allocation6 [shape = 'u8[4096]{0}', space=vmem, size = 0x1000, scoped, tag = 'output window, operand 0']
    #allocation7 [shape = 's32[2]{0}', space=sflag, size = 0x8, scoped, tag = 'scoped memory for tpu_custom_call.1']
    %11 = vsyncpa [#allocation7], 0
    %s12 = scalar_lea.sflag [#allocation7], 1
    %13 = vsyncpa %s12, 0
    loop: start=0, step=1, limit=9
    $region2: #{tpu_custom_call.1} parent=1 // loop_pre_header
      _
    $region3: #{tpu_custom_call.1} parent=1 // loop_header
      %s15 = sphi 0, %s19
      %p16 = scmp.ge.s32.totalorder %s15, 9
      %s24 = sphi 0, %s26
      %s27 = sphi 0, %s24
      %s37 = sphi 0, %s27
    $region4: #{tpu_custom_call.1} parent=1 // loop_header_branch
      %18 = sbr.rel (%p16) target = $region8
    $region5: #{tpu_custom_call.1} parent=1 // loop_body
      %s20 = ssub.s32 %s15, 1
      %s21 = sadd.s32 %s15, 1
      %s22 = ssub.s32 %s15, %s21
      %p23 = scmp.eq.s32.totalorder %s22, 0
      %s25 = sadd.s32 %s24, 1
      %s26 = scalar_select %p23, %s24, %s25
      %p28 = pneg %p23
      %p29 = scmp.eq.s32.totalorder %s15, 7
      %p30 = por %p28, %p29
      %p31 = scmp.ne.s32.totalorder %s24, %s27
      %p32 = scmp.eq.s32.totalorder %s15, 0
      %p33 = por %p31, %p32
      %p34 = scmp.ne.s32.totalorder %s24, %s27
      %p35 = scmp.eq.s32.totalorder %s20, 7
      %p36 = por %p34, %p35
      %p38 = scmp.ne.s32.totalorder %s27, %s37
      %p39 = scmp.eq.s32.totalorder %s20, 0
      %p40 = por %p38, %p39
      %p41 = scmp.lt.s32.totalorder %s15, 8
      // Predicated region
      $region9: #{tpu_custom_call.1} parent=5 // pred_check
        %p42 = pneg %p41
      $region10: #{tpu_custom_call.1} parent=5 // pred_check_branch
        %44 = sbr.rel (%p42) target = $region12
      $region11: #{tpu_custom_call.1} parent=5 // pred_region
        %p45 = pneg %p33
        %p46 = pneg %p30
        %s47 = sand.u32 %s24, 1
        %s48 = scalar_lea.sflag [#allocation7], %s47
        %s49 = sand.u32 %s24, 1
        %s50 = smul.addr %s49, 4
        %s51 = scalar_lea.vmem [#allocation6], %s50
        %s52 = smul.u32 %s15, 8
        %s53 = sld [smem:[#allocation5 + %s52]]
        %p54 = scmp.gt.s32.totalorder %s53, 0
        %s55 = scalar_select %p54, %s53, 0
        %p56 = scmp.lt.s32.totalorder %s55, 63
        %s57 = scalar_select %p56, %s55, 63
        %s58 = smul.addr %s57, 16
        %s59 = scalar_lea.hbm %s1, %s58
        // Predicated region
        $region13: #{tpu_custom_call.1} parent=11 // pred_check
          _
        $region14: #{tpu_custom_call.1} parent=11 // pred_check_branch
          %61 = sbr.rel target = $region16
        $region15: #{tpu_custom_call.1} parent=11 // pred_region
          %62 = sst [smem:[#allocation10]] [#allocation9]
          %63 = sst [smem:[#allocation11]] [#allocation8]
        $region16: #{tpu_custom_call.1} parent=11 // pred_fallthru
          _
        %65 = shalt.err (0)
        %s67 = sshll.u32 [#allocation2], 4
        %s68 = int_to_ptr.vmem [resolvable:$true] %s67
        %70 = dma.hbm_to_vmem [thread:$0]  %s59, 16, %s68, [#allocation3]
        %s71 = sadd.s32 %s52, 1
        %s72 = sld [smem:[#allocation5 + %s71]]
        %p73 = scmp.gt.s32.totalorder %s72, 0
        %s74 = scalar_select %p73, %s72, 0
        %p75 = scmp.lt.s32.totalorder %s74, 63
        %s76 = scalar_select %p75, %s74, 63
        %s77 = smul.addr %s76, 16
        %s78 = scalar_lea.hbm %s1, %s77
        %s79 = scalar_lea.vmem [#allocation2], 1
        %s80 = scalar_lea.sflag [#allocation3], 1
        // Predicated region
        $region17: #{tpu_custom_call.1} parent=11 // pred_check
          _
        $region18: #{tpu_custom_call.1} parent=11 // pred_check_branch
          %82 = sbr.rel target = $region20
        $region19: #{tpu_custom_call.1} parent=11 // pred_region
          %83 = sst [smem:[#allocation10]] [#allocation13]
          %84 = sst [smem:[#allocation11]] [#allocation12]
        $region20: #{tpu_custom_call.1} parent=11 // pred_fallthru
          _
        %86 = shalt.err (0)
        %s88 = sshll.u32 %s79, 4
        %s89 = int_to_ptr.vmem [resolvable:$true] %s88
        %91 = dma.hbm_to_vmem [thread:$0]  %s78, 16, %s89, %s80
        %s92 = sadd.s32 %s52, 2
        %s93 = sld [smem:[#allocation5 + %s92]]
        %p94 = scmp.gt.s32.totalorder %s93, 0
        %s95 = scalar_select %p94, %s93, 0
        %p96 = scmp.lt.s32.totalorder %s95, 63
        %s97 = scalar_select %p96, %s95, 63
        %s98 = smul.addr %s97, 16
        %s99 = scalar_lea.hbm %s1, %s98
        %s100 = scalar_lea.vmem [#allocation2], 2
        %s101 = scalar_lea.sflag [#allocation3], 2
        // Predicated region
        $region21: #{tpu_custom_call.1} parent=11 // pred_check
          _
        $region22: #{tpu_custom_call.1} parent=11 // pred_check_branch
          %103 = sbr.rel target = $region24
        $region23: #{tpu_custom_call.1} parent=11 // pred_region
          %104 = sst [smem:[#allocation10]] [#allocation15]
          %105 = sst [smem:[#allocation11]] [#allocation14]
        $region24: #{tpu_custom_call.1} parent=11 // pred_fallthru
          _
        %107 = shalt.err (0)
        %s109 = sshll.u32 %s100, 4
        %s110 = int_to_ptr.vmem [resolvable:$true] %s109
        %112 = dma.hbm_to_vmem [thread:$0]  %s99, 16, %s110, %s101
        %s113 = sadd.s32 %s52, 3
        %s114 = sld [smem:[#allocation5 + %s113]]
        %p115 = scmp.gt.s32.totalorder %s114, 0
        %s116 = scalar_select %p115, %s114, 0
        %p117 = scmp.lt.s32.totalorder %s116, 63
        %s118 = scalar_select %p117, %s116, 63
        %s119 = smul.addr %s118, 16
        %s120 = scalar_lea.hbm %s1, %s119
        %s121 = scalar_lea.vmem [#allocation2], 3
        %s122 = scalar_lea.sflag [#allocation3], 3
        // Predicated region
        $region25: #{tpu_custom_call.1} parent=11 // pred_check
          _
        $region26: #{tpu_custom_call.1} parent=11 // pred_check_branch
          %124 = sbr.rel target = $region28
        $region27: #{tpu_custom_call.1} parent=11 // pred_region
          %125 = sst [smem:[#allocation10]] [#allocation17]
          %126 = sst [smem:[#allocation11]] [#allocation16]
        $region28: #{tpu_custom_call.1} parent=11 // pred_fallthru
          _
        %128 = shalt.err (0)
        %s130 = sshll.u32 %s121, 4
        %s131 = int_to_ptr.vmem [resolvable:$true] %s130
        %133 = dma.hbm_to_vmem [thread:$0]  %s120, 16, %s131, %s122
        %s134 = sadd.s32 %s52, 4
        %s135 = sld [smem:[#allocation5 + %s134]]
        %p136 = scmp.gt.s32.totalorder %s135, 0
        %s137 = scalar_select %p136, %s135, 0
        %p138 = scmp.lt.s32.totalorder %s137, 63
        %s139 = scalar_select %p138, %s137, 63
        %s140 = smul.addr %s139, 16
        %s141 = scalar_lea.hbm %s1, %s140
        %s142 = scalar_lea.vmem [#allocation2], 4
        %s143 = scalar_lea.sflag [#allocation3], 4
        // Predicated region
        $region29: #{tpu_custom_call.1} parent=11 // pred_check
          _
        $region30: #{tpu_custom_call.1} parent=11 // pred_check_branch
          %145 = sbr.rel target = $region32
        $region31: #{tpu_custom_call.1} parent=11 // pred_region
          %146 = sst [smem:[#allocation10]] [#allocation19]
          %147 = sst [smem:[#allocation11]] [#allocation18]
        $region32: #{tpu_custom_call.1} parent=11 // pred_fallthru
          _
        %149 = shalt.err (0)
        %s151 = sshll.u32 %s142, 4
        %s152 = int_to_ptr.vmem [resolvable:$true] %s151
        %154 = dma.hbm_to_vmem [thread:$0]  %s141, 16, %s152, %s143
        %s155 = sadd.s32 %s52, 5
        %s156 = sld [smem:[#allocation5 + %s155]]
        %p157 = scmp.gt.s32.totalorder %s156, 0
        %s158 = scalar_select %p157, %s156, 0
        %p159 = scmp.lt.s32.totalorder %s158, 63
        %s160 = scalar_select %p159, %s158, 63
        %s161 = smul.addr %s160, 16
        %s162 = scalar_lea.hbm %s1, %s161
        %s163 = scalar_lea.vmem [#allocation2], 5
        %s164 = scalar_lea.sflag [#allocation3], 5
        // Predicated region
        $region33: #{tpu_custom_call.1} parent=11 // pred_check
          _
        $region34: #{tpu_custom_call.1} parent=11 // pred_check_branch
          %166 = sbr.rel target = $region36
        $region35: #{tpu_custom_call.1} parent=11 // pred_region
          %167 = sst [smem:[#allocation10]] [#allocation21]
          %168 = sst [smem:[#allocation11]] [#allocation20]
        $region36: #{tpu_custom_call.1} parent=11 // pred_fallthru
          _
        %170 = shalt.err (0)
        %s172 = sshll.u32 %s163, 4
        %s173 = int_to_ptr.vmem [resolvable:$true] %s172
        %175 = dma.hbm_to_vmem [thread:$0]  %s162, 16, %s173, %s164
        %s176 = sadd.s32 %s52, 6
        %s177 = sld [smem:[#allocation5 + %s176]]
        %p178 = scmp.gt.s32.totalorder %s177, 0
        %s179 = scalar_select %p178, %s177, 0
        %p180 = scmp.lt.s32.totalorder %s179, 63
        %s181 = scalar_select %p180, %s179, 63
        %s182 = smul.addr %s181, 16
        %s183 = scalar_lea.hbm %s1, %s182
        %s184 = scalar_lea.vmem [#allocation2], 6
        %s185 = scalar_lea.sflag [#allocation3], 6
        // Predicated region
        $region37: #{tpu_custom_call.1} parent=11 // pred_check
          _
        $region38: #{tpu_custom_call.1} parent=11 // pred_check_branch
          %187 = sbr.rel target = $region40
        $region39: #{tpu_custom_call.1} parent=11 // pred_region
          %188 = sst [smem:[#allocation10]] [#allocation23]
          %189 = sst [smem:[#allocation11]] [#allocation22]
        $region40: #{tpu_custom_call.1} parent=11 // pred_fallthru
          _
        %191 = shalt.err (0)
        %s193 = sshll.u32 %s184, 4
        %s194 = int_to_ptr.vmem [resolvable:$true] %s193
        %196 = dma.hbm_to_vmem [thread:$0]  %s183, 16, %s194, %s185
        %s197 = sadd.s32 %s52, 7
        %s198 = sld [smem:[#allocation5 + %s197]]
        %p199 = scmp.gt.s32.totalorder %s198, 0
        %s200 = scalar_select %p199, %s198, 0
        %p201 = scmp.lt.s32.totalorder %s200, 63
        %s202 = scalar_select %p201, %s200, 63
        %s203 = smul.addr %s202, 16
        %s204 = scalar_lea.hbm %s1, %s203
        %s205 = scalar_lea.vmem [#allocation2], 7
        %s206 = scalar_lea.sflag [#allocation3], 7
        // Predicated region
        $region41: #{tpu_custom_call.1} parent=11 // pred_check
          _
        $region42: #{tpu_custom_call.1} parent=11 // pred_check_branch
          %208 = sbr.rel target = $region44
        $region43: #{tpu_custom_call.1} parent=11 // pred_region
          %209 = sst [smem:[#allocation10]] [#allocation25]
          %210 = sst [smem:[#allocation11]] [#allocation24]
        $region44: #{tpu_custom_call.1} parent=11 // pred_fallthru
          _
        %212 = shalt.err (0)
        %s214 = sshll.u32 %s205, 4
        %s215 = int_to_ptr.vmem [resolvable:$true] %s214
        %217 = dma.hbm_to_vmem [thread:$0]  %s204, 16, %s215, %s206
        %219 = dma.done [#allocation3], 16
        %221 = dma.done %s80, 16
        %223 = dma.done %s101, 16
        %225 = dma.done %s122, 16
        %227 = dma.done %s143, 16
        %229 = dma.done %s164, 16
        %231 = dma.done %s185, 16
        %233 = dma.done %s206, 16
        %v234 = vld [vmem:[#allocation2] sm:$0xff]
        %v235 = vpack.c.bf16 %v234, %v234
        %236 = vst [vmem:[%s51] sm:$0xf] %v235
        %s237 = sand.u32 %s24, 1
        %s238 = scalar_lea.sflag [#allocation7], %s237
        %s239 = sand.u32 %s24, 1
        %s240 = smul.addr %s239, 4
        %s241 = scalar_lea.vmem [#allocation6], %s240
        // Predicated region
        $region45: #{tpu_custom_call.1} parent=11 // pred_check
          %p242 = pneg %p30
        $region46: #{tpu_custom_call.1} parent=11 // pred_check_branch
          %244 = sbr.rel (%p242) target = $region48
        $region47: #{tpu_custom_call.1} parent=11 // pred_region
          %s246 = ssub.s32 64, 64
          %247 = vsyncadd %s238, %s246
          %s248 = smul.addr %s15, 64
          %s249 = scalar_lea.hbm %s2, %s248
          %s251 = sshll.u32 %s241, 4
          %s252 = int_to_ptr.vmem [resolvable:$true] %s251
          %254 = dma.vmem_to_hbm [thread:$0]  %s252, 64, %s249, %s238
        $region48: #{tpu_custom_call.1} parent=11 // pred_fallthru
          _
      $region12: #{tpu_custom_call.1} parent=5 // pred_fallthru
        _
      %p255 = scmp.le.s32.totalorder 1, %s15
      // Predicated region
      $region49: #{tpu_custom_call.1} parent=5 // pred_check
        %p256 = pneg %p255
      $region50: #{tpu_custom_call.1} parent=5 // pred_check_branch
        %258 = sbr.rel (%p256) target = $region52
      $region51: #{tpu_custom_call.1} parent=5 // pred_region
        %s259 = ssub.s32 %s15, 1
        // Predicated region
        $region53: #{tpu_custom_call.1} parent=51 // pred_check
          %p260 = pneg %p36
        $region54: #{tpu_custom_call.1} parent=51 // pred_check_branch
          %262 = sbr.rel (%p260) target = $region56
        $region55: #{tpu_custom_call.1} parent=51 // pred_region
          %s263 = sand.u32 %s27, 1
          %s264 = scalar_lea.sflag [#allocation7], %s263
          %s265 = sand.u32 %s27, 1
          %s266 = smul.addr %s265, 4
          %s267 = scalar_lea.vmem [#allocation6], %s266
          %268 = dma.done %s264, 64
        $region56: #{tpu_custom_call.1} parent=51 // pred_fallthru
          _
      $region52: #{tpu_custom_call.1} parent=5 // pred_fallthru
        _
    $region6: #{tpu_custom_call.1} parent=1 // loop_footer
      %s19 = sadd.s32 1, %s15
    $region7: #{tpu_custom_call.1} parent=1 // loop_footer_branch
      %14 = sbr.rel target = $region3
    $region8: #{tpu_custom_call.1} parent=1 // loop_exit
      _
    %269 = vsyncpa [#allocation7], 1
    %s270 = scalar_lea.sflag [#allocation7], 1
    %271 = vsyncpa %s270, 1
  %272 = vsyncmov [#allocation3]
  %s273 = vpop.sfrf %272
  %p274 = scmp.eq.s32.totalorder %s273, 0
  %p275 = pneg %p274
  %277 = shalt.err (%p275)
  %s278 = scalar_lea.sflag [#allocation3], 1
  %279 = vsyncmov %s278
  %s280 = vpop.sfrf %279
  %p281 = scmp.eq.s32.totalorder %s280, 0
  %p282 = pneg %p281
  %284 = shalt.err (%p282)
  %s285 = scalar_lea.sflag [#allocation3], 2
  %286 = vsyncmov %s285
  %s287 = vpop.sfrf %286
  %p288 = scmp.eq.s32.totalorder %s287, 0
  %p289 = pneg %p288
  %291 = shalt.err (%p289)
  %s292 = scalar_lea.sflag [#allocation3], 3
  %293 = vsyncmov %s292
  %s294 = vpop.sfrf %293
  %p295 = scmp.eq.s32.totalorder %s294, 0
  %p296 = pneg %p295
  %298 = shalt.err (%p296)
  %s299 = scalar_lea.sflag [#allocation3], 4
  %300 = vsyncmov %s299
  %s301 = vpop.sfrf %300
  %p302 = scmp.eq.s32.totalorder %s301, 0
  %p303 = pneg %p302
  %305 = shalt.err (%p303)
  %s306 = scalar_lea.sflag [#allocation3], 5
  %307 = vsyncmov %s306
  %s308 = vpop.sfrf %307
  %p309 = scmp.eq.s32.totalorder %s308, 0
  %p310 = pneg %p309
  %312 = shalt.err (%p310)
  %s313 = scalar_lea.sflag [#allocation3], 6
  %314 = vsyncmov %s313
  %s315 = vpop.sfrf %314
  %p316 = scmp.eq.s32.totalorder %s315, 0
  %p317 = pneg %p316
  %319 = shalt.err (%p317)
  %s320 = scalar_lea.sflag [#allocation3], 7
  %321 = vsyncmov %s320
  %s322 = vpop.sfrf %321
  %p323 = scmp.eq.s32.totalorder %s322, 0
  %p324 = pneg %p323
  %326 = shalt.err (%p324)

</llo_original>
